<compile_context>
chip_gen: v6e
topology: v6e:2x2x1
jax: 0.10.0
libtpu: 0.0.40
codegen_flags: <defaults>
</compile_context>

<pallas_src>
import math

import jax
import jax.numpy as jnp
from jax.experimental import pallas as pl
from jax.experimental.pallas import tpu as pltpu


def _lcl_kernel(x_ref, w_ref, b_ref, o_ref):
    """One dense block-diagonal matmul per grid step.

    x_ref: (TN, GB*K)       streamed activation tile (lane-dense)
    w_ref: (1, GB*K, GB*M)  block-diagonal weight slab, VMEM-resident across N
    b_ref: (1, 1, GB*M)     flat bias for the GB packed groups
    o_ref: (TN, GB*M)       lane-dense output tile
    """
    acc = jnp.dot(x_ref[...], w_ref[0], preferred_element_type=jnp.float32)
    o_ref[...] = (acc + b_ref[0].astype(jnp.float32)).astype(o_ref.dtype)


def _round_up(x, m):
    return ((x + m - 1) // m) * m


def _sublane(dtype):
    # second-to-last block dim must be a multiple of 8 (4B) / 16 (2B) / 32 (1B)
    return {1: 32, 2: 16, 4: 8}.get(jnp.dtype(dtype).itemsize, 8)


def _choose_group_block(groups, k, m, itemsize, max_lanes=2048,
                        max_slab_bytes=8 * 1024 * 1024):
    """Smallest divisor gb of `groups` whose packed widths gb*K and gb*M are both
    multiples of 128 (lane-dense x/out blocks, unmasked stores) and whose weight
    slab stays small.  Fallback: gb == groups, where every packed block dim
    equals the full array dim (legal blocks even when not a 128-multiple)."""
    for gb in range(1, groups + 1):
        if groups % gb:
            continue
        if ((gb * k) % 128 == 0 and (gb * m) % 128 == 0
                and gb * k <= max_lanes and gb * m <= max_lanes
                and gb * k * gb * m * itemsize <= max_slab_bytes):
            return gb
    # TODO(synk): for very large G with lane-unfriendly K/M, pad K/M per group
    # inside the packed slab instead of falling back to the full group dim.
    return groups


def _choose_tn(n, gb, k, m, itemsize, sub, vmem_limit_bytes):
    """Largest useful N tile: streamed x/out double-buffers plus the resident
    weight slab must fit ~70% of the VMEM limit, and padding waste for awkward
    N is minimized over {1024, 512, 256, 128}."""
    resident = 2 * (gb * k * gb * m + gb * m) * itemsize        # w slab + bias (x2 buf)
    budget = int(vmem_limit_bytes * 0.7) - resident
    per_row = 2 * gb * (k + m) * itemsize                       # x + out, double-buffered
    cap = max(sub, (budget // max(per_row, 1)) // sub * sub)
    if n <= 1024:
        return min(cap, _round_up(max(n, 1), sub))
    cands = [t for t in (1024, 512, 256, 128) if t <= cap]
    if not cands:
        return cap
    # minimize padded rows; break ties toward the larger tile (fewer grid steps)
    return min(cands, key=lambda t: (_round_up(n, t) - n, -t))


def locally_connected(x, weight, bias=None, *, tn=None, vmem_limit_bytes=None):
    """x: (G, N, K), weight: (G, K, M), bias: (G, M) or None -> (G, N, M).
    Same math as torch.bmm(x, weight) + bias.unsqueeze(1)."""
    G, N, K = x.shape
    Gw, Kw, M = weight.shape
    assert (Gw, Kw) == (G, K), "weight must be (groups, K, M) matching x"

    dtype = x.dtype
    itemsize = jnp.dtype(dtype).itemsize
    sub = _sublane(dtype)
    weight = weight.astype(dtype)

    if vmem_limit_bytes is None:
        try:
            cap = getattr(pltpu.get_tpu_info(), "vmem_capacity_bytes",
                          64 * 1024 * 1024)
            # ~half of physical VMEM: 64 MiB on v5e/v6e (128 MiB), 32 MiB on v7x (64 MiB)
            vmem_limit_bytes = int(min(64 * 1024 * 1024, cap // 2))
        except Exception:  # conservative fallback if the query is unavailable
            vmem_limit_bytes = 32 * 1024 * 1024

    gb = _choose_group_block(G, K, M, itemsize)
    ng = G // gb

    if tn is None:
        tn = _choose_tn(N, gb, K, M, itemsize, sub, vmem_limit_bytes)
    tn = _round_up(int(tn), sub)
    n_tiles = pl.cdiv(N, tn)  # ragged last N tile handled by Pallas partial blocks

    # ---- layout plumbing (no x pad, no output slice) -------------------------
    # x: (G, N, K) -> lane-dense streaming layout (N, G*K)
    x_flat = jnp.transpose(x, (1, 0, 2)).reshape(N, G * K)
    # weight: (G, K, M) -> block-diagonal slabs (ng, gb*K, gb*M): one dense MXU
    # matmul per grid step instead of gb tiny K-deep contractions.
    w5 = weight.reshape(ng, gb, K, M)
    eye = jnp.eye(gb, dtype=weight.dtype)
    w_bd = jnp.einsum("ngkm,gh->ngkhm", w5, eye).reshape(ng, gb * K, gb * M)
    if bias is None:
        b_flat = jnp.zeros((ng, 1, gb * M), dtype=dtype)
    else:
        b_flat = bias.astype(dtype).reshape(ng, 1, gb * M)

    # Group-block axis leads so a megacore (v7x) shards it and weight slabs stay
    # per-core resident; on single-TC chips dimension_semantics is a no-op.
    dims = ("parallel", "arbitrary") if ng >= 2 else ("arbitrary", "parallel")

    flops = 2 * G * N * K * M
    bytes_accessed = itemsize * (x_flat.size + w_bd.size + b_flat.size + N * G * M)

    # TODO(synk): add an innermost "arbitrary" K grid axis + f32 VMEM accumulator
    # once gb*K*gb*M*itemsize approaches ~1/4 of the VMEM limit (v7x: 64 MiB/TC).
    # TODO(synk): single-buffer (pl.Buffered(1)) the ni-invariant weight/bias
    # specs on v7x to halve their VMEM charge.
    out_flat = pl.pallas_call(
        _lcl_kernel,
        out_shape=jax.ShapeDtypeStruct((N, G * M), dtype),
        grid_spec=pltpu.PrefetchScalarGridSpec(
            num_scalar_prefetch=0,
            grid=(ng, n_tiles),
            in_specs=[
                pl.BlockSpec((tn, gb * K), lambda gi, ni: (ni, gi)),
                pl.BlockSpec((1, gb * K, gb * M), lambda gi, ni: (gi, 0, 0)),
                pl.BlockSpec((1, 1, gb * M), lambda gi, ni: (gi, 0, 0)),
            ],
            out_specs=pl.BlockSpec((tn, gb * M), lambda gi, ni: (ni, gi)),
        ),
        compiler_params=pltpu.CompilerParams(
            dimension_semantics=dims,
            vmem_limit_bytes=int(vmem_limit_bytes),
        ),
        cost_estimate=pl.CostEstimate(
            flops=int(flops), transcendentals=0,
            bytes_accessed=int(bytes_accessed)),
    )(x_flat, w_bd, b_flat)

    # back to torch.bmm's (G, N, M) output layout
    return jnp.transpose(out_flat.reshape(N, G, M), (1, 0, 2))


def make_params(key, in_features, out_features, groups, dtype=jnp.float32):
    """Deterministic re-implementation of LocallyConnectedLayer.__init__."""
    k_w, k_b = jax.random.split(key)
    kpg = in_features // groups
    mpg = out_features // groups
    weight = jax.random.normal(k_w, (groups, kpg, mpg), dtype=dtype)
    bound = 1.0 / math.sqrt(kpg)
    bias = jax.random.uniform(
        k_b, (groups, mpg), dtype=dtype, minval=-bound, maxval=bound
    )
    return weight, bias


if __name__ == "__main__":
    key = jax.random.PRNGKey(0)
    k_x, k_p, k_x2, k_p2 = jax.random.split(key, 4)

    # ---- case 1: tiny shapes, fallback gb == G, ragged single tile ----------
    groups, in_features, out_features, batch = 4, 32, 32, 12
    weight, bias = make_params(k_p, in_features, out_features, groups)
    x = jax.random.normal(k_x, (groups, batch, in_features // groups),
                          dtype=jnp.float32)
    ref = jnp.einsum("gnk,gkm->gnm", x, weight) + bias[:, None, :]

    out = jax.block_until_ready(locally_connected(x, weight, bias))
    assert out.shape == (groups, batch, out_features // groups)
    assert jnp.allclose(out, ref, atol=1e-4, rtol=1e-4)

    # explicit tiny N tile -> multi-step ragged grid
    out_tiled = jax.block_until_ready(locally_connected(x, weight, bias, tn=8))
    assert jnp.allclose(out_tiled, ref, atol=1e-4, rtol=1e-4)

    # no-bias path
    out_nb = jax.block_until_ready(locally_connected(x, weight, None))
    assert jnp.allclose(out_nb, ref - bias[:, None, :], atol=1e-4, rtol=1e-4)

    # ---- case 2: lane-friendly packing (gb*K = gb*M = 128), ng = 2, ragged N -
    groups2, inf2, outf2, batch2 = 32, 256, 256, 70
    weight2, bias2 = make_params(k_p2, inf2, outf2, groups2)
    x2 = jax.random.normal(k_x2, (groups2, batch2, inf2 // groups2),
                           dtype=jnp.float32)
    ref2 = jnp.einsum("gnk,gkm->gnm", x2, weight2) + bias2[:, None, :]
    out2 = jax.block_until_ready(locally_connected(x2, weight2, bias2))
    assert jnp.allclose(out2, ref2, atol=1e-4, rtol=1e-4)

    # ---- case 3: bf16 storage, f32 accumulation ------------------------------
    xb = x2.astype(jnp.bfloat16)
    wb = weight2.astype(jnp.bfloat16)
    bb = bias2.astype(jnp.bfloat16)
    refb = (jnp.einsum("gnk,gkm->gnm", xb.astype(jnp.float32),
                       wb.astype(jnp.float32))
            + bb.astype(jnp.float32)[:, None, :])
    outb = jax.block_until_ready(locally_connected(xb, wb, bb))
    assert outb.dtype == jnp.bfloat16
    assert jnp.allclose(outb.astype(jnp.float32), refb, atol=5e-2, rtol=5e-2)

    print("KERNEL_OK")
</pallas_src>

<mosaic_0001>
module attributes {stable_mosaic.version = 11 : i64} {
  func.func @_lcl_kernel(%arg0: i32, %arg1: i32, %arg2: memref<16x32xf32, #tpu.memory_space<vmem>>, %arg3: memref<1x32x32xf32, #tpu.memory_space<vmem>>, %arg4: memref<1x1x32xf32, #tpu.memory_space<vmem>>, %arg5: memref<16x32xf32, #tpu.memory_space<vmem>>) attributes {dimension_semantics = [#tpu.dimension_semantics<arbitrary>, #tpu.dimension_semantics<parallel>], iteration_bounds = array<i64: 1, 1>, scalar_prefetch = 0 : i64, scratch_operands = 0 : i64, tpu.core_type = #tpu.core_type<tc>, window_params = [{transform_indices = @transform_0, window_bounds = array<i64: 16, 32>}, {transform_indices = @transform_1, window_bounds = array<i64: 1, 32, 32>}, {transform_indices = @transform_2, window_bounds = array<i64: 1, 1, 32>}, {transform_indices = @transform_3, window_bounds = array<i64: 16, 32>}]} {
    %c0 = arith.constant 0 : index
    %c0_0 = arith.constant 0 : index
    %0 = vector.load %arg2[%c0, %c0_0] : memref<16x32xf32, #tpu.memory_space<vmem>>, vector<16x32xf32>
    %c0_1 = arith.constant 0 : index
    %c0_2 = arith.constant 0 : index
    %c0_3 = arith.constant 0 : index
    %1 = vector.load %arg3[%c0_1, %c0_2, %c0_3] : memref<1x32x32xf32, #tpu.memory_space<vmem>>, vector<1x32x32xf32>
    %2 = vector.shape_cast %1 : vector<1x32x32xf32> to vector<32x32xf32>
    %cst = arith.constant dense<0.000000e+00> : vector<16x32xf32>
    %3 = tpu.matmul %0, %2, %cst {dimension_numbers = #tpu.dot_dimension_numbers<[1], [0], [0], [1], [0, 0, 1, 1], [], []>} : vector<16x32xf32>, vector<32x32xf32>, vector<16x32xf32> -> vector<16x32xf32>
    %c0_4 = arith.constant 0 : index
    %c0_5 = arith.constant 0 : index
    %c0_6 = arith.constant 0 : index
    %4 = vector.load %arg4[%c0_4, %c0_5, %c0_6] : memref<1x1x32xf32, #tpu.memory_space<vmem>>, vector<1x1x32xf32>
    %5 = vector.shape_cast %4 : vector<1x1x32xf32> to vector<1x32xf32>
    %6 = vector.broadcast %5 : vector<1x32xf32> to vector<16x32xf32>
    %7 = arith.addf %3, %6 : vector<16x32xf32>
    %c0_7 = arith.constant 0 : index
    %c0_8 = arith.constant 0 : index
    %8 = vector.load %arg5[%c0_7, %c0_8] : memref<16x32xf32, #tpu.memory_space<vmem>>, vector<16x32xf32>
    tpu.vector_store %arg5[%c0_7, %c0_8], %7 {strides = array<i32>} : memref<16x32xf32, #tpu.memory_space<vmem>>, vector<16x32xf32>,
    return
  }
  func.func @transform_0(%arg0: i32, %arg1: i32) -> (i32, i32) {
    %c0_i32 = arith.constant 0 : i32
    return %arg1, %arg0 : i32, i32
  }
  func.func @transform_1(%arg0: i32, %arg1: i32) -> (i32, i32, i32) {
    %c0_i32 = arith.constant 0 : i32
    %c0_i32_0 = arith.constant 0 : i32
    %c0_i32_1 = arith.constant 0 : i32
    return %arg0, %c0_i32, %c0_i32_0 : i32, i32, i32
  }
  func.func @transform_2(%arg0: i32, %arg1: i32) -> (i32, i32, i32) {
    %c0_i32 = arith.constant 0 : i32
    %c0_i32_0 = arith.constant 0 : i32
    %c0_i32_1 = arith.constant 0 : i32
    return %arg0, %c0_i32, %c0_i32_0 : i32, i32, i32
  }
  func.func @transform_3(%arg0: i32, %arg1: i32) -> (i32, i32) {
    %c0_i32 = arith.constant 0 : i32
    return %arg1, %arg0 : i32, i32
  }
}

</mosaic_0001>

<llo_original>
// kernel: tpu_custom_call.1
$region0: #{tpu_custom_call.1}
  #allocation0 [shape = 'u32[]', space=smem, size = 0x4, offset = 0x4, fixed_abs, tag = 'smem constant byte address 0x4 - core index']
  #allocation1 [shape = 'u32[144,128]{1,0:T(1,128)}', space=vmem, size = 0x12000, scoped, tag = 'internal scratch']
  %s0 = inlined_call_operand.hbm [shape: f32[12,32], index: 0, kind: input, shape index: {}]
  %s1 = inlined_call_operand.hbm [shape: f32[1,32,32], index: 1, kind: input, shape index: {}]
  %s2 = inlined_call_operand.vmem [shape: f32[1,1,32], index: 2, kind: input, shape index: {}]
  %s3 = inlined_call_operand.hbm [shape: f32[12,32], index: 3, kind: output, shape index: {}]
  %s4 = sld [smem:[#allocation0]]
  $region30: #{tpu_custom_call.1} parent=0
    _
  %s6 = ssub.s32 1, %s4
  %s7 = scalar_select 0, %s6, %s4
  $region1: #{tpu_custom_call.1} parent=0
    #allocation2 [shape = 'u8[8192]{0}', space=vmem, size = 0x2000, scoped, tag = 'input window, operand 0, single buffered']
    #allocation3 [shape = 's32[1]{0}', space=sflag, size = 0x4, scoped, tag = 'scoped memory for tpu_custom_call.1']
    #allocation4 [shape = 's32[1]{0}', space=sflag, size = 0x4, scoped, tag = 'scoped memory for tpu_custom_call.1']
    #allocation5 [shape = 'u8[16384]{0}', space=vmem, size = 0x4000, scoped, tag = 'input window, operand 1, single buffered']
    #allocation6 [shape = 's32[1]{0}', space=sflag, size = 0x4, scoped, tag = 'scoped memory for tpu_custom_call.1']
    #allocation7 [shape = 'u8[8192]{0}', space=vmem, size = 0x2000, scoped, tag = 'output window, operand 0, single buffered']
    %8 = vsyncpa [#allocation3], 0
    %9 = vsyncpa [#allocation6], 0
    %10 = vsyncpa [#allocation4], 0
    // Predicated region
    $region2: #{tpu_custom_call.1} parent=1 // pred_check
      _
    $region3: #{tpu_custom_call.1} parent=1 // pred_check_branch
      %12 = sbr.rel (0) target = $region5
    $region4: #{tpu_custom_call.1} parent=1 // pred_region
      %s14 = ssub.s32 256, 256
      %15 = vsyncadd [#allocation3], %s14
      %s16 = sshll.u32 [#allocation2], 4
      %s17 = int_to_ptr.vmem [resolvable:$true] %s16
      %22 = dma.hbm_to_vmem [thread:$0]  %s0, 256, %s17, [#allocation3], 128, 128, 8
    $region5: #{tpu_custom_call.1} parent=1 // pred_fallthru
      _
    // Predicated region
    $region6: #{tpu_custom_call.1} parent=1 // pred_check
      _
    $region7: #{tpu_custom_call.1} parent=1 // pred_check_branch
      %24 = sbr.rel (0) target = $region9
    $region8: #{tpu_custom_call.1} parent=1 // pred_region
      %s26 = ssub.s32 512, 512
      %27 = vsyncadd [#allocation6], %s26
      %s28 = sshll.u32 [#allocation5], 4
      %s29 = int_to_ptr.vmem [resolvable:$true] %s28
      %34 = dma.hbm_to_vmem [thread:$0]  %s1, 512, %s29, [#allocation6], 128, 128, 8
    $region9: #{tpu_custom_call.1} parent=1 // pred_fallthru
      _
    // Predicated region
    $region10: #{tpu_custom_call.1} parent=1 // pred_check
      _
    $region11: #{tpu_custom_call.1} parent=1 // pred_check_branch
      %36 = sbr.rel (0) target = $region13
    $region12: #{tpu_custom_call.1} parent=1 // pred_region
      _
    $region13: #{tpu_custom_call.1} parent=1 // pred_fallthru
      _
    // Predicated region
    $region14: #{tpu_custom_call.1} parent=1 // pred_check
      _
    $region15: #{tpu_custom_call.1} parent=1 // pred_check_branch
      %38 = sbr.rel (0) target = $region17
    $region16: #{tpu_custom_call.1} parent=1 // pred_region
      %39 = dma.done [#allocation3], 256
    $region17: #{tpu_custom_call.1} parent=1 // pred_fallthru
      _
    // Predicated region
    $region18: #{tpu_custom_call.1} parent=1 // pred_check
      _
    $region19: #{tpu_custom_call.1} parent=1 // pred_check_branch
      %41 = sbr.rel (0) target = $region21
    $region20: #{tpu_custom_call.1} parent=1 // pred_region
      %42 = dma.done [#allocation6], 512
    $region21: #{tpu_custom_call.1} parent=1 // pred_fallthru
      _
    %v43 = vld [vmem:[#allocation2] sm:$0xff]
    %v44 = vld [vmem:[#allocation2 + $0x8] sm:$0xff]
    %v45 = vld [vmem:[#allocation5] sm:$0xff]
    %v46 = vld [vmem:[#allocation5 + $0x8] sm:$0xff]
    %v47 = vld [vmem:[#allocation5 + $0x10] sm:$0xff]
    %v48 = vld [vmem:[#allocation5 + $0x18] sm:$0xff]
    %v49 = vld [vmem:[%s2] sm:$0x1]
    %v51 = vlaneseq
    %v52 = vshrl.u32 %v51, 7
    %v53 = vsub.s32 0, %v52
    %v54 = vrot.slane %v49, %v53
    %vm56 = vcmask 261120
    %v58 = vsel %vm56, %v43, 0
    %v61 = vsel %vm56, %v44, 0
    %63 = vmatprep.subr.mxu0 0.0
    %64 = vmatpush1.msra.mxu0 0.0
    %65 = vmatprep.subr.mxu0 0.0
    %66 = vmatpush1.msra.mxu0 0.0
    %67 = vmatprep.subr.mxu0 0.0
    %68 = vmatpush1.msra.mxu0 0.0
    %69 = vmatprep.subr.mxu0 0.0
    %70 = vmatpush1.msra.mxu0 0.0
    %71 = vmatprep.subr.mxu0 0.0
    %72 = vmatpush1.msra.mxu0 0.0
    %73 = vmatprep.subr.mxu0 0.0
    %74 = vmatpush1.msra.mxu0 0.0
    %75 = vmatprep.subr.mxu0 0.0
    %76 = vmatpush1.msra.mxu0 0.0
    %77 = vmatprep.subr.mxu0 0.0
    %78 = vmatpush1.msra.mxu0 0.0
    %79 = vmatprep.subr.mxu0 0.0
    %80 = vmatpush1.msra.mxu0 0.0
    %81 = vmatprep.subr.mxu0 0.0
    %82 = vmatpush1.msra.mxu0 0.0
    %83 = vmatprep.subr.mxu0 0.0
    %84 = vmatpush1.msra.mxu0 0.0
    %85 = vmatprep.subr.mxu0 0.0
    %86 = vmatpush1.msra.mxu0 0.0
    %87 = vmatprep.subr.mxu0 0.0
    %88 = vmatpush1.msra.mxu0 %v48
    %89 = vmatprep.subr.mxu0 0.0
    %90 = vmatpush1.msra.mxu0 %v47
    %91 = vmatprep.subr.mxu0 0.0
    %92 = vmatpush1.msra.mxu0 %v46
    %93 = vmatprep.subr.mxu0 0.0
    %94 = vmatpush1.msra.mxu0 %v45
    %95 = vmatprep.subr.mxu0 0.0
    %96 = vmatpush2.msra.mxu0 0.0
    %97 = vmatprep.subr.mxu0 0.0
    %98 = vmatpush2.msra.mxu0 0.0
    %99 = vmatprep.subr.mxu0 0.0
    %100 = vmatpush2.msra.mxu0 0.0
    %101 = vmatprep.subr.mxu0 0.0
    %102 = vmatpush2.msra.mxu0 0.0
    %103 = vmatprep.subr.mxu0 0.0
    %104 = vmatpush2.msra.mxu0 0.0
    %105 = vmatprep.subr.mxu0 0.0
    %106 = vmatpush2.msra.mxu0 0.0
    %107 = vmatprep.subr.mxu0 0.0
    %108 = vmatpush2.msra.mxu0 0.0
    %109 = vmatprep.subr.mxu0 0.0
    %110 = vmatpush2.msra.mxu0 0.0
    %111 = vmatprep.subr.mxu0 0.0
    %112 = vmatpush2.msra.mxu0 0.0
    %113 = vmatprep.subr.mxu0 0.0
    %114 = vmatpush2.msra.mxu0 0.0
    %115 = vmatprep.subr.mxu0 0.0
    %116 = vmatpush2.msra.mxu0 0.0
    %117 = vmatprep.subr.mxu0 0.0
    %118 = vmatpush2.msra.mxu0 0.0
    %119 = vmatprep.subr.mxu0 0.0
    %120 = vmatpush2.msra.mxu0 0.0
    %121 = vmatprep.subr.mxu0 0.0
    %122 = vmatpush2.msra.mxu0 0.0
    %123 = vmatprep.subr.mxu0 0.0
    %124 = vmatpush2.msra.mxu0 0.0
    %125 = vmatprep.subr.mxu0 0.0
    %126 = vmatpush2.msra.mxu0 0.0
    %127 = vmatprep.mubr.f32.mxu0 0.0
    %128 = vmatmul.mubr.f32.gmra.mxu0 %v58
    %v129 = vpop.f32.mrf.mxu0
    %v130 = vadd.f32 %v54, %v129
    %v131 = vpop.f32.mrf.mxu0
    %132 = vmatprep.mubr.f32.mxu0 0.0
    %133 = vmatmul.mubr.f32.gmra.mxu0 %v61
    %v134 = vpop.f32.mrf.mxu0
    %v135 = vadd.f32 %v54, %v134
    %v136 = vpop.f32.mrf.mxu0
    %137 = vdwg.mxu0
    %138 = vst.msk [vmem:[#allocation7] sm:$0xff] %vm56, %v130
    %139 = vst.msk [vmem:[#allocation7 + $0x8] sm:$0xff] %vm56, %v135
    // Predicated region
    $region22: #{tpu_custom_call.1} parent=1 // pred_check
      _
    $region23: #{tpu_custom_call.1} parent=1 // pred_check_branch
      %141 = sbr.rel (0) target = $region25
    $region24: #{tpu_custom_call.1} parent=1 // pred_region
      %s143 = ssub.s32 256, 256
      %144 = vsyncadd [#allocation4], %s143
      %s145 = sshll.u32 [#allocation7], 4
      %s146 = int_to_ptr.vmem [resolvable:$true] %s145
      %151 = dma.vmem_to_hbm [thread:$0]  %s146, 256, %s3, [#allocation4], 128, 128, 8
    $region25: #{tpu_custom_call.1} parent=1 // pred_fallthru
      _
    // Predicated region
    $region26: #{tpu_custom_call.1} parent=1 // pred_check
      _
    $region27: #{tpu_custom_call.1} parent=1 // pred_check_branch
      %153 = sbr.rel (0) target = $region29
    $region28: #{tpu_custom_call.1} parent=1 // pred_region
      %154 = dma.done [#allocation4], 256
    $region29: #{tpu_custom_call.1} parent=1 // pred_fallthru
      _
    %155 = vsyncpa [#allocation3], 1
    %156 = vsyncpa [#allocation6], 1
    %157 = vsyncpa [#allocation4], 1

</llo_original>
